<compile_context>
chip_gen: v7x
topology: tpu7x:2x2x1
jax: 0.10.0
libtpu: 0.0.40
codegen_flags: <defaults>
</compile_context>

<pallas_src>
import functools
import math

import jax
import jax.numpy as jnp
from jax.experimental import pallas as pl
from jax.experimental.pallas import tpu as pltpu


def _sinusoidal_pe_kernel(pos_ref, freq_ref, phase_ref, grp_ref, out_ref, *,
                          padding_idx, num_groups):
    """One tile: out[n, k] = sin(pos[n, k//D] * freq[k] + phase[k]) (0 for pads).

    pos_ref  : (TM, G)  f32  exact integer positions, G positions per output row
    freq_ref : (1, W)   f32  freq[k]  = inv_freq[(k % D) % half]   (0 on odd tail)
    phase_ref: (1, W)   f32  phase[k] = 0 (sin half) / pi/2 (cos half) / 0 (tail)
    grp_ref  : (1, W)   i32  lane -> group id (k // D)
    out_ref  : (TM, W)  f32  W = G*D, multiple of 128 on the main path
    """
    pg = pos_ref[...]                      # (TM, G)
    grp = grp_ref[...]                     # (1, W)
    tm = pg.shape[0]
    w = grp.shape[1]

    # Replicate each group's position across its D lanes.  Pure VPU work
    # (lane-broadcast + select), exact in f32, unrolled over the small static
    # group count (G <= 8).
    pos_rep = jnp.zeros((tm, w), jnp.float32)
    for g in range(num_groups):
        pos_rep = jnp.where(grp == g, pg[:, g:g + 1], pos_rep)

    ang = pos_rep * freq_ref[...] + phase_ref[...]         # lane-dense (TM, W)
    val = jnp.sin(ang)                                     # one transcendental/elem

    # Row `padding_idx` of the reference table is all zeros -> pads emit zeros.
    out_ref[...] = jnp.where(pos_rep != jnp.float32(padding_idx), val,
                             jnp.float32(0.0))


def _pick_tm(n_rows, w):
    """Row tile: multiple of 8 dividing n_rows, padded output block <= ~4 MiB,
    and >= 2 grid tiles whenever n_rows allows it (v7x has 2 TensorCores)."""
    if n_rows % 8 != 0:
        return n_rows                      # small / irregular input: one full block
    w_pad = -(-w // 128) * 128             # VMEM lane padding of the last dim
    budget_rows = max(8, (4 * 1024 * 1024) // (4 * w_pad))
    limit = min(budget_rows, n_rows // 2) if n_rows >= 16 else n_rows
    limit = max(limit, 8)
    best, d = 8, 8
    while d <= limit:
        if n_rows % d == 0:
            best = d
        d += 8
    return best


def sinusoidal_positional_embedding(input_ids, embedding_dim, padding_idx):
    """input_ids: (B, S) integer token ids. Returns (B, S, embedding_dim) f32."""
    B, S = input_ids.shape
    D = embedding_dim
    half = D // 2

    # ---- make_positions: tiny (B, S) int op done in the wrapper so the kernel
    # grid has no sequential dependency.  positions < 2^24 -> exact in f32.
    ids = input_ids.astype(jnp.int32)
    mask = (ids != padding_idx).astype(jnp.int32)
    positions = jnp.cumsum(mask, axis=1) * mask + padding_idx       # (B, S) int32

    # ---- per-channel frequency / phase table.  cos(x) == sin(x + pi/2); the
    # odd-D tail channel gets freq = phase = 0 -> sin(0) = 0 like the reference.
    # NOTE: like the reference, half == 1 (D == 2 or 3) is degenerate (div by 0
    # in the exponent); we guard the division to avoid a crash.
    scale = math.log(10000.0) / (half - 1) if half > 1 else math.log(10000.0)
    inv_freq = jnp.exp(jnp.arange(half, dtype=jnp.float32) * jnp.float32(-scale))
    tail = D - 2 * half
    freq_d = jnp.concatenate(
        [inv_freq, inv_freq, jnp.zeros((tail,), jnp.float32)])
    phase_d = jnp.concatenate(
        [jnp.zeros((half,), jnp.float32),
         jnp.full((half,), math.pi / 2, dtype=jnp.float32),
         jnp.zeros((tail,), jnp.float32)])

    # ---- lane-dense flat layout: view the row-major output (B, S, D) as
    # (B*S/G, G*D) with G*D a multiple of 128, so every vreg of sin/VPU work and
    # every output store uses all 128 lanes.  Fallback (G=1, W=D) only for
    # shapes where the regrouping is impossible (still correct, lane-sparse).
    if D % 128 == 0:
        G = 1
    else:
        g0 = math.lcm(D, 128) // D
        G = g0 if (g0 <= 8 and (B * S) % g0 == 0) else 1
    W = G * D
    N = (B * S) // G

    pos_g = positions.reshape(N, G).astype(jnp.float32)             # (N, G)
    freq_w = jnp.tile(freq_d, G)[None, :]                           # (1, W)
    phase_w = jnp.tile(phase_d, G)[None, :]                         # (1, W)
    grp_w = (jnp.arange(W, dtype=jnp.int32) // D)[None, :]          # (1, W)

    TM = _pick_tm(N, W)
    grid = (N // TM,)

    kernel = functools.partial(_sinusoidal_pe_kernel,
                               padding_idx=padding_idx, num_groups=G)

    cost = pl.CostEstimate(
        flops=N * W * (2 * G + 4),          # repeat selects + mul/add + mask
        transcendentals=N * W,              # one sin per output element
        bytes_accessed=N * G * 4 + N * W * 4 + 3 * W * 4)

    out_flat = pl.pallas_call(
        kernel,
        out_shape=jax.ShapeDtypeStruct((N, W), jnp.float32),
        grid=grid,
        in_specs=[
            pl.BlockSpec((TM, G), lambda i: (i, 0)),    # positions (tiled)
            pl.BlockSpec((1, W), lambda i: (0, 0)),     # freq   (resident)
            pl.BlockSpec((1, W), lambda i: (0, 0)),     # phase  (resident)
            pl.BlockSpec((1, W), lambda i: (0, 0)),     # lane->group (resident)
        ],
        out_specs=pl.BlockSpec((TM, W), lambda i: (i, 0)),
        compiler_params=pltpu.CompilerParams(
            dimension_semantics=("parallel",),
            vmem_limit_bytes=32 * 1024 * 1024),
        cost_estimate=cost,
    )(pos_g, freq_w, phase_w, grp_w)

    # Free row-major regroup back to (B, S, D).
    return out_flat.reshape(B, S, D)


# ------------- pure-JAX reference (table + gather, mirrors the torch code) -------------
def _get_embedding_ref(num_embeddings, embedding_dim, padding_idx):
    half_dim = embedding_dim // 2
    e = math.log(10000.0) / (half_dim - 1)
    e = jnp.exp(jnp.arange(half_dim, dtype=jnp.float32) * -e)
    e = jnp.arange(num_embeddings, dtype=jnp.float32)[:, None] * e[None, :]
    e = jnp.concatenate([jnp.sin(e), jnp.cos(e)], axis=1)
    if embedding_dim % 2 == 1:
        e = jnp.concatenate([e, jnp.zeros((num_embeddings, 1), jnp.float32)], axis=1)
    e = e.at[padding_idx].set(0.0)
    return e


def _forward_ref(input_ids, embedding_dim, padding_idx):
    bsz, seq_len = input_ids.shape
    max_pos = padding_idx + 1 + seq_len
    weights = _get_embedding_ref(max_pos, embedding_dim, padding_idx)
    mask = (input_ids != padding_idx).astype(jnp.int32)
    positions = jnp.cumsum(mask, axis=1) * mask + padding_idx
    return weights[positions.reshape(-1)].reshape(bsz, seq_len, -1)


# TODO(synk): incremental_state/timestep single-step decode path is not implemented
# (it is a trivial single-row lookup, not a kernel-worthy op).

if __name__ == "__main__":
    padding_idx = 0
    key = jax.random.PRNGKey(0)
    k1, k2 = jax.random.split(key)

    # Small shape consistent with the module: [bsz, seq_len] ids, hidden=32.
    B, S, D = 2, 16, 32
    ids_small = jax.random.randint(k1, (B, S), 0, 10, dtype=jnp.int32)
    out = jax.block_until_ready(
        sinusoidal_positional_embedding(ids_small, D, padding_idx))
    ref = _forward_ref(ids_small, D, padding_idx)
    assert out.shape == (B, S, D) and out.dtype == jnp.float32
    assert jnp.allclose(out, ref, atol=1e-5, rtol=1e-5)

    # Larger shape exercising the multi-tile grid (N = 4096 rows -> grid = (2,)).
    B2, S2, D2 = 16, 1024, 32
    ids_big = jax.random.randint(k2, (B2, S2), 0, 10, dtype=jnp.int32)
    out2 = jax.block_until_ready(
        sinusoidal_positional_embedding(ids_big, D2, padding_idx))
    ref2 = _forward_ref(ids_big, D2, padding_idx)
    assert out2.shape == (B2, S2, D2)
    # cos is computed as sin(x + pi/2): at angles up to ~S the folded-phase
    # rounding is |x| * 2^-24 ~ 6e-5, hence the slightly looser tolerance here.
    assert jnp.allclose(out2, ref2, atol=3e-4, rtol=1e-5)

    print("KERNEL_OK")
</pallas_src>

<mosaic_0001>
module attributes {stable_mosaic.version = 11 : i64} {
  func.func @_sinusoidal_pe_kernel(%arg0: i32, %arg1: memref<8x4xf32, #tpu.memory_space<vmem>>, %arg2: memref<1x128xf32, #tpu.memory_space<vmem>>, %arg3: memref<1x128xf32, #tpu.memory_space<vmem>>, %arg4: memref<1x128xi32, #tpu.memory_space<vmem>>, %arg5: memref<8x128xf32, #tpu.memory_space<vmem>>) attributes {dimension_semantics = [#tpu.dimension_semantics<parallel>], iteration_bounds = array<i64: 1>, scalar_prefetch = 0 : i64, scratch_operands = 0 : i64, tpu.core_type = #tpu.core_type<tc>, window_params = [{transform_indices = @transform_0, window_bounds = array<i64: 8, 4>}, {pipeline_mode = #tpu.pipeline_mode<synchronous>, transform_indices = @transform_1, window_bounds = array<i64: 1, 128>}, {pipeline_mode = #tpu.pipeline_mode<synchronous>, transform_indices = @transform_2, window_bounds = array<i64: 1, 128>}, {pipeline_mode = #tpu.pipeline_mode<synchronous>, transform_indices = @transform_3, window_bounds = array<i64: 1, 128>}, {transform_indices = @transform_4, window_bounds = array<i64: 8, 128>}]} {
    %c0 = arith.constant 0 : index
    %c0_0 = arith.constant 0 : index
    %0 = vector.load %arg1[%c0, %c0_0] : memref<8x4xf32, #tpu.memory_space<vmem>>, vector<8x4xf32>
    %c0_1 = arith.constant 0 : index
    %c0_2 = arith.constant 0 : index
    %1 = vector.load %arg4[%c0_1, %c0_2] : memref<1x128xi32, #tpu.memory_space<vmem>>, vector<1x128xi32>
    %cst = arith.constant 0.000000e+00 : f32
    %2 = vector.broadcast %cst : f32 to vector<8x128xf32>
    %c0_i32 = arith.constant 0 : i32
    %3 = vector.broadcast %c0_i32 : i32 to vector<1x128xi32>
    %4 = arith.cmpi eq, %1, %3 : vector<1x128xi32>
    %5 = vector.extract_strided_slice %0 {offsets = [0, 0], sizes = [8, 1], strides = [1, 1]} : vector<8x4xf32> to vector<8x1xf32>
    %6 = vector.shape_cast %4 : vector<1x128xi1> to vector<1x128xi1>
    %7 = vector.broadcast %6 : vector<1x128xi1> to vector<8x128xi1>
    %8 = vector.shape_cast %5 : vector<8x1xf32> to vector<8x1xf32>
    %9 = vector.broadcast %8 : vector<8x1xf32> to vector<8x128xf32>
    %10 = arith.select %7, %9, %2 : vector<8x128xi1>, vector<8x128xf32>
    %c1_i32 = arith.constant 1 : i32
    %11 = vector.broadcast %c1_i32 : i32 to vector<1x128xi32>
    %12 = arith.cmpi eq, %1, %11 : vector<1x128xi32>
    %13 = vector.extract_strided_slice %0 {offsets = [0, 1], sizes = [8, 1], strides = [1, 1]} : vector<8x4xf32> to vector<8x1xf32>
    %14 = vector.shape_cast %12 : vector<1x128xi1> to vector<1x128xi1>
    %15 = vector.broadcast %14 : vector<1x128xi1> to vector<8x128xi1>
    %16 = vector.shape_cast %13 : vector<8x1xf32> to vector<8x1xf32>
    %17 = vector.broadcast %16 : vector<8x1xf32> to vector<8x128xf32>
    %18 = arith.select %15, %17, %10 : vector<8x128xi1>, vector<8x128xf32>
    %c2_i32 = arith.constant 2 : i32
    %19 = vector.broadcast %c2_i32 : i32 to vector<1x128xi32>
    %20 = arith.cmpi eq, %1, %19 : vector<1x128xi32>
    %21 = vector.extract_strided_slice %0 {offsets = [0, 2], sizes = [8, 1], strides = [1, 1]} : vector<8x4xf32> to vector<8x1xf32>
    %22 = vector.shape_cast %20 : vector<1x128xi1> to vector<1x128xi1>
    %23 = vector.broadcast %22 : vector<1x128xi1> to vector<8x128xi1>
    %24 = vector.shape_cast %21 : vector<8x1xf32> to vector<8x1xf32>
    %25 = vector.broadcast %24 : vector<8x1xf32> to vector<8x128xf32>
    %26 = arith.select %23, %25, %18 : vector<8x128xi1>, vector<8x128xf32>
    %c3_i32 = arith.constant 3 : i32
    %27 = vector.broadcast %c3_i32 : i32 to vector<1x128xi32>
    %28 = arith.cmpi eq, %1, %27 : vector<1x128xi32>
    %29 = vector.extract_strided_slice %0 {offsets = [0, 3], sizes = [8, 1], strides = [1, 1]} : vector<8x4xf32> to vector<8x1xf32>
    %30 = vector.shape_cast %28 : vector<1x128xi1> to vector<1x128xi1>
    %31 = vector.broadcast %30 : vector<1x128xi1> to vector<8x128xi1>
    %32 = vector.shape_cast %29 : vector<8x1xf32> to vector<8x1xf32>
    %33 = vector.broadcast %32 : vector<8x1xf32> to vector<8x128xf32>
    %34 = arith.select %31, %33, %26 : vector<8x128xi1>, vector<8x128xf32>
    %c0_3 = arith.constant 0 : index
    %c0_4 = arith.constant 0 : index
    %35 = vector.load %arg2[%c0_3, %c0_4] : memref<1x128xf32, #tpu.memory_space<vmem>>, vector<1x128xf32>
    %36 = vector.broadcast %35 : vector<1x128xf32> to vector<8x128xf32>
    %37 = arith.mulf %34, %36 : vector<8x128xf32>
    %c0_5 = arith.constant 0 : index
    %c0_6 = arith.constant 0 : index
    %38 = vector.load %arg3[%c0_5, %c0_6] : memref<1x128xf32, #tpu.memory_space<vmem>>, vector<1x128xf32>
    %39 = vector.broadcast %38 : vector<1x128xf32> to vector<8x128xf32>
    %40 = arith.addf %37, %39 : vector<8x128xf32>
    %41 = math.sin %40 : vector<8x128xf32>
    %cst_7 = arith.constant 0.000000e+00 : f32
    %42 = vector.broadcast %cst_7 : f32 to vector<8x128xf32>
    %43 = arith.cmpf one, %34, %42 : vector<8x128xf32>
    %cst_8 = arith.constant 0.000000e+00 : f32
    %44 = vector.broadcast %cst_8 : f32 to vector<8x128xf32>
    %45 = arith.select %43, %41, %44 : vector<8x128xi1>, vector<8x128xf32>
    %c0_9 = arith.constant 0 : index
    %c0_10 = arith.constant 0 : index
    %46 = vector.load %arg5[%c0_9, %c0_10] : memref<8x128xf32, #tpu.memory_space<vmem>>, vector<8x128xf32>
    tpu.vector_store %arg5[%c0_9, %c0_10], %45 {strides = array<i32>} : memref<8x128xf32, #tpu.memory_space<vmem>>, vector<8x128xf32>,
    return
  }
  func.func @transform_0(%arg0: i32) -> (i32, i32) {
    %c0_i32 = arith.constant 0 : i32
    %c0_i32_0 = arith.constant 0 : i32
    return %arg0, %c0_i32 : i32, i32
  }
  func.func @transform_1(%arg0: i32) -> (i32, i32) {
    %c0_i32 = arith.constant 0 : i32
    %c0_i32_0 = arith.constant 0 : i32
    %c0_i32_1 = arith.constant 0 : i32
    return %c0_i32, %c0_i32_0 : i32, i32
  }
  func.func @transform_2(%arg0: i32) -> (i32, i32) {
    %c0_i32 = arith.constant 0 : i32
    %c0_i32_0 = arith.constant 0 : i32
    %c0_i32_1 = arith.constant 0 : i32
    return %c0_i32, %c0_i32_0 : i32, i32
  }
  func.func @transform_3(%arg0: i32) -> (i32, i32) {
    %c0_i32 = arith.constant 0 : i32
    %c0_i32_0 = arith.constant 0 : i32
    %c0_i32_1 = arith.constant 0 : i32
    return %c0_i32, %c0_i32_0 : i32, i32
  }
  func.func @transform_4(%arg0: i32) -> (i32, i32) {
    %c0_i32 = arith.constant 0 : i32
    %c0_i32_0 = arith.constant 0 : i32
    return %arg0, %c0_i32 : i32, i32
  }
}

</mosaic_0001>

<llo_original>
// kernel: tpu_custom_call.1
$region0: #{tpu_custom_call.1}
  #allocation0 [shape = 'u32[]', space=smem, size = 0x4, offset = 0x4, fixed_abs, tag = 'smem constant byte address 0x4 - core index']
  #allocation1 [shape = 'u32[144,128]{1,0:T(1,128)}', space=vmem, size = 0x12000, scoped, tag = 'internal scratch']
  %s0 = inlined_call_operand.vmem [shape: f32[8,4], index: 0, kind: input, shape index: {}]
  %s1 = inlined_call_operand.vmem [shape: f32[1,128], index: 1, kind: input, shape index: {}]
  %s2 = inlined_call_operand.vmem [shape: f32[1,128], index: 2, kind: input, shape index: {}]
  %s3 = inlined_call_operand.vmem [shape: s32[1,128], index: 3, kind: input, shape index: {}]
  %s4 = inlined_call_operand.hbm [shape: f32[8,128], index: 4, kind: output, shape index: {}]
  %s5 = sld [smem:[#allocation0]]
  $region26: #{tpu_custom_call.1} parent=0
    _
  %s7 = ssub.s32 1, %s5
  %s8 = scalar_select 0, %s7, %s5
  $region1: #{tpu_custom_call.1} parent=0
    #allocation2 [shape = 'u8[4096]{0}', space=vmem, size = 0x1000, scoped, tag = 'output window, operand 0, single buffered']
    #allocation3 [shape = 's32[1]{0}', space=sflag, size = 0x4, scoped, tag = 'scoped memory for tpu_custom_call.1']
    %9 = vsyncpa [#allocation3], 0
    // Predicated region
    $region2: #{tpu_custom_call.1} parent=1 // pred_check
      _
    $region3: #{tpu_custom_call.1} parent=1 // pred_check_branch
      %11 = sbr.rel (0) target = $region5
    $region4: #{tpu_custom_call.1} parent=1 // pred_region
      _
    $region5: #{tpu_custom_call.1} parent=1 // pred_fallthru
      _
    // Predicated region
    $region6: #{tpu_custom_call.1} parent=1 // pred_check
      _
    $region7: #{tpu_custom_call.1} parent=1 // pred_check_branch
      %13 = sbr.rel (0) target = $region9
    $region8: #{tpu_custom_call.1} parent=1 // pred_region
      _
    $region9: #{tpu_custom_call.1} parent=1 // pred_fallthru
      _
    // Predicated region
    $region10: #{tpu_custom_call.1} parent=1 // pred_check
      _
    $region11: #{tpu_custom_call.1} parent=1 // pred_check_branch
      %15 = sbr.rel (0) target = $region13
    $region12: #{tpu_custom_call.1} parent=1 // pred_region
      _
    $region13: #{tpu_custom_call.1} parent=1 // pred_fallthru
      _
    // Predicated region
    $region14: #{tpu_custom_call.1} parent=1 // pred_check
      _
    $region15: #{tpu_custom_call.1} parent=1 // pred_check_branch
      %17 = sbr.rel (0) target = $region17
    $region16: #{tpu_custom_call.1} parent=1 // pred_region
      _
    $region17: #{tpu_custom_call.1} parent=1 // pred_fallthru
      _
    %v18 = vld [vmem:[%s0] sm:$0xff]
    %v19 = vld [vmem:[%s3] sm:$0x1]
    %vm20 = vcmp.eq.s32.totalorder %v19, 0
    %v21 = vsel %vm20, 1, 0
    %v22 = vlaneseq
    %v23 = vshrl.u32 %v22, 7
    %v24 = vsub.s32 0, %v23
    %v25 = vrot.slane %v21, %v24
    %vm26 = vcmp.eq.s32.totalorder %v25, 1
    %28 = vset.pattern.permute.xlu0 0
    %29 = vperm.xlu0 %28, %v18
    %v30 = vpop.permute.xlu0 %29
    %v32 = vsel %vm26, %v30, 0.0
    %vm33 = vcmp.eq.s32.totalorder %v19, 1
    %v34 = vsel %vm33, 1, 0
    %v35 = vlaneseq
    %v36 = vshrl.u32 %v35, 7
    %v37 = vsub.s32 0, %v36
    %v38 = vrot.slane %v34, %v37
    %vm39 = vcmp.eq.s32.totalorder %v38, 1
    %40 = vset.pattern.permute.xlu0 1
    %41 = vperm.xlu0 %40, %v18
    %v42 = vpop.permute.xlu0 %41
    %v44 = vsel %vm39, %v42, %v32
    %vm45 = vcmp.eq.s32.totalorder %v19, 2
    %v46 = vsel %vm45, 1, 0
    %v47 = vlaneseq
    %v48 = vshrl.u32 %v47, 7
    %v49 = vsub.s32 0, %v48
    %v50 = vrot.slane %v46, %v49
    %vm51 = vcmp.eq.s32.totalorder %v50, 1
    %52 = vset.pattern.permute.xlu0 2
    %53 = vperm.xlu0 %52, %v18
    %v54 = vpop.permute.xlu0 %53
    %v56 = vsel %vm51, %v54, %v44
    %vm57 = vcmp.eq.s32.totalorder %v19, 3
    %v58 = vsel %vm57, 1, 0
    %v59 = vlaneseq
    %v60 = vshrl.u32 %v59, 7
    %v61 = vsub.s32 0, %v60
    %v62 = vrot.slane %v58, %v61
    %vm63 = vcmp.eq.s32.totalorder %v62, 1
    %64 = vset.pattern.permute.xlu0 3
    %65 = vperm.xlu0 %64, %v18
    %v66 = vpop.permute.xlu0 %65
    %v68 = vsel %vm63, %v66, %v56
    %v69 = vld [vmem:[%s1] sm:$0x1]
    %v71 = vlaneseq
    %v72 = vshrl.u32 %v71, 7
    %v73 = vsub.s32 0, %v72
    %v74 = vrot.slane %v69, %v73
    %v76 = vmul.f32 %v68, %v74
    %v77 = vld [vmem:[%s2] sm:$0x1]
    %v79 = vlaneseq
    %v80 = vshrl.u32 %v79, 7
    %v81 = vsub.s32 0, %v80
    %v82 = vrot.slane %v77, %v81
    %v84 = vadd.f32 %v76, %v82
    %v85 = vand.u32 2147483647, %v84
    %vm86 = vcmp.le.f32.partialorder %v85, 0.7853982
    %vm87 = vcmp.lt.s32.totalorder %v84, 0
    %v88 = vand.u32 %v84, 2139095040
    %v89 = vshrl.u32 %v88, 23
    %v90 = vsub.s32 %v89, 127
    %v91 = vand.u32 2147483647, %v84
    %v92 = vand.u32 %v91, 8388607
    %v93 = vor.u32 %v92, 8388608
    %v94 = vsub.s32 0, %v93
    %v95 = vadd.s32 %v90, 1
    %vm96 = vcmp.gt.s32.totalorder %v95, 0
    %v97 = vsel %vm96, %v95, 0
    %v98 = vshrl.u32 %v97, 5
    %v99 = vand.u32 %v97, 31
    %v100 = vsub.s32 32, %v99
    %v101 = vshrl.u32 683565275, %v100
    %v102 = vshll.u32 683565275, %v99
    %v103 = vshrl.u32 2475754826, %v100
    %v104 = vor.u32 %v102, %v103
    %v105 = vshll.u32 2475754826, %v99
    %v106 = vshrl.u32 2131351028, %v100
    %v107 = vor.u32 %v105, %v106
    %v108 = vshll.u32 2131351028, %v99
    %v109 = vshrl.u32 2102212464, %v100
    %v110 = vor.u32 %v108, %v109
    %v111 = vshll.u32 2102212464, %v99
    %v112 = vshrl.u32 920167782, %v100
    %v113 = vor.u32 %v111, %v112
    %v114 = vshll.u32 920167782, %v99
    %v115 = vshrl.u32 1326507024, %v100
    %v116 = vor.u32 %v114, %v115
    %vm117 = vcmp.lt.s32.totalorder %v98, 1
    %vm118 = vcmp.lt.s32.totalorder %v98, 2
    %vm119 = vcmp.lt.s32.totalorder %v98, 3
    %vm120 = vcmp.lt.s32.totalorder %v98, 4
    %v121 = vsel %vm117, %v101, %v104
    %v122 = vsel %vm120, %v110, 2102212464
    %v123 = vsel %vm119, %v107, %v122
    %v124 = vsel %vm118, %v121, %v123
    %v125 = vsel %vm117, %v104, %v107
    %v126 = vsel %vm120, %v113, 920167782
    %v127 = vsel %vm119, %v110, %v126
    %v128 = vsel %vm118, %v125, %v127
    %v129 = vsel %vm117, %v107, %v110
    %v130 = vsel %vm120, %v116, 1326507024
    %v131 = vsel %vm119, %v113, %v130
    %v132 = vsel %vm118, %v129, %v131
    %v133 = vshll.u32 %v93, 8
    %v134 = vmul.u32.u64.compose %v133, %v132
    %v135 = vextract.low.u32 %v134
    %v136 = vextract.high.u32 %v134
    %v137 = vmul.u32.u64.compose %v133, %v128
    %v138 = vextract.low.u32 %v137
    %v139 = vextract.high.u32 %v137
    %v140 = vmul.u32 %v133, %v124
    %v141 = vadd.s32 %v136, %v138
    %vm142 = vc.u32 %v136, %v138
    %v143 = vadd.s32 %v139, 1
    %v144 = vsel %vm142, %v143, %v139
    %v145 = vadd.s32 %v140, %v144
    %v146 = vadd.s32 %v145, 536870912
    %v147 = vshrl.u32 %v146, 30
    %v148 = vshll.u32 %v147, 30
    %v149 = vsub.s32 %v145, %v148
    %vm150 = vcmp.lt.s32.totalorder %v149, 0
    %v151 = vsub.s32 0, %v149
    %v152 = vsel %vm150, %v151, %v149
    %v153 = vclz %v152
    %v154 = vsub.s32 %v153, 2
    %vm155 = vcmp.gt.s32.totalorder 0, %v154
    %v156 = vsel %vm155, 0, %v154
    %v157 = vsub.s32 32, %v156
    %v158 = vshll.u32 %v149, %v156
    %v159 = vshrl.u32 %v141, %v157
    %v160 = vor.u32 %v158, %v159
    %v161 = vsub.s32 4294967266, %v156
    %v162 = vadd.s32 %v161, 127
    %v163 = vshll.u32 %v162, 23
    %v164 = vor.u32 4788187, %v163
    %v165 = vand.u32 2147483647, %v164
    %v167 = vcvt.s32.f32 %v160
    %v168 = vmul.f32 %v167, %v165
    %v169 = vxor.u32 %v168, 2147483648
    %v170 = vsel %vm87, %v169, %v168
    %v171 = vsub.s32 4, %v147
    %v172 = vsel %vm87, %v171, %v147
    %v173 = vsel %vm86, %v84, %v170
    %v174 = vsel %vm86, 0, %v172
    %v175 = vcosq.f32.pop %v173
    %v176 = vsinq.f32.pop %v173
    %vm177 = vweird.f32 %v84
    %v178 = vadd.s32 %v174, 3
    %v179 = vand.u32 %v178, 3
    %vm180 = vcmp.lt.s32.totalorder %v179, 2
    %vm181 = vcmp.eq.s32.totalorder %v179, 0
    %v182 = vxor.u32 %v176, 2147483648
    %v183 = vsel %vm181, %v175, %v182
    %vm184 = vcmp.eq.s32.totalorder %v179, 2
    %v185 = vxor.u32 %v175, 2147483648
    %v186 = vsel %vm184, %v185, %v176
    %v187 = vsel %vm180, %v183, %v186
    %v188 = vsel %vm177, nan, %v187
    %vm189 = vcmp.ne.f32.partialorder %v68, 0.0
    %v190 = vsel %vm189, %v188, 0.0
    %191 = vst [vmem:[#allocation2] sm:$0xff] %v190
    // Predicated region
    $region18: #{tpu_custom_call.1} parent=1 // pred_check
      _
    $region19: #{tpu_custom_call.1} parent=1 // pred_check_branch
      %193 = sbr.rel (0) target = $region21
    $region20: #{tpu_custom_call.1} parent=1 // pred_region
      %s195 = ssub.s32 128, 128
      %196 = vsyncadd [#allocation3], %s195
      %s198 = sshll.u32 [#allocation2], 4
      %s199 = int_to_ptr.vmem [resolvable:$true] %s198
      %201 = dma.vmem_to_hbm [thread:$0]  %s199, 128, %s4, [#allocation3]
    $region21: #{tpu_custom_call.1} parent=1 // pred_fallthru
      _
    // Predicated region
    $region22: #{tpu_custom_call.1} parent=1 // pred_check
      _
    $region23: #{tpu_custom_call.1} parent=1 // pred_check_branch
      %203 = sbr.rel (0) target = $region25
    $region24: #{tpu_custom_call.1} parent=1 // pred_region
      %204 = dma.done [#allocation3], 128
    $region25: #{tpu_custom_call.1} parent=1 // pred_fallthru
      _
    %205 = vsyncpa [#allocation3], 1

</llo_original>
